<compile_context>
chip_gen: v7x
topology: tpu7x:2x2x1
jax: 0.10.0
libtpu: 0.0.40
codegen_flags: <defaults>
</compile_context>

<pallas_src>
import math
from functools import partial

import jax
import jax.numpy as jnp
from jax.experimental import pallas as pl
from jax.experimental.pallas import tpu as pltpu


def _round_up(x, m):
    return ((x + m - 1) // m) * m


# --------------------------------------------------------------------------- #
# Kernel
# --------------------------------------------------------------------------- #
def _policy_kernel(x_ref, w1_ref, w2_ref, w3_ref, b_ref, out_ref, *, h1p, h2p, outp):
    # fc1 + ReLU  (bf16 MXU inputs, f32 accumulation; elementwise in f32)
    h1 = jnp.dot(x_ref[...], w1_ref[...], preferred_element_type=jnp.float32)
    h1 = jnp.maximum(h1 + b_ref[0:1, :h1p], 0.0)
    # fc2 + ReLU
    h2 = jnp.dot(h1.astype(jnp.bfloat16), w2_ref[...],
                 preferred_element_type=jnp.float32)
    h2 = jnp.maximum(h2 + b_ref[1:2, :h2p], 0.0)
    # probs_fc (logits head, no activation)
    logits = jnp.dot(h2.astype(jnp.bfloat16), w3_ref[...],
                     preferred_element_type=jnp.float32)
    out_ref[...] = (logits + b_ref[2:3, :outp]).astype(out_ref.dtype)


# --------------------------------------------------------------------------- #
# Wrapper
# --------------------------------------------------------------------------- #
def prepare_params(params):
    """Pad + cast weights once (do NOT redo this every forward in a rollout loop)."""
    w1, b1, w2, b2, w3, b3 = params
    d_in, h1_dim = w1.shape
    h2_dim = w2.shape[1]
    out_dim = w3.shape[1]

    d_p = _round_up(d_in, 128)
    h1_p = _round_up(h1_dim, 128)
    h2_p = _round_up(h2_dim, 128)
    out_p = _round_up(out_dim, 128)
    lane = max(h1_p, h2_p, out_p)

    def pad2(a, rows, cols):
        return jnp.pad(a, ((0, rows - a.shape[0]), (0, cols - a.shape[1])))

    # Zero padding keeps the sliced [:, :out_dim] result exact.
    w1p = pad2(w1, d_p, h1_p).astype(jnp.bfloat16)
    w2p = pad2(w2, h1_p, h2_p).astype(jnp.bfloat16)
    w3p = pad2(w3, h2_p, out_p).astype(jnp.bfloat16)

    bias = jnp.zeros((3, lane), jnp.float32)
    bias = bias.at[0, :h1_dim].set(b1.reshape(-1))
    bias = bias.at[1, :h2_dim].set(b2.reshape(-1))
    bias = bias.at[2, :out_dim].set(b3.reshape(-1))

    dims = dict(d_in=d_in, d_p=d_p, h1_p=h1_p, h2_p=h2_p,
                out_dim=out_dim, out_p=out_p, lane=lane)
    return (w1p, w2p, w3p, bias), dims


def policy_forward(state, prepared, dims, tb_max=512):
    """Fused 3-layer MLP. state: [B, dim_h] f32. Returns logits [B, sum(nvec)] f32."""
    w1p, w2p, w3p, bias = prepared
    B = state.shape[0]
    d_in, d_p = dims["d_in"], dims["d_p"]
    h1_p, h2_p = dims["h1_p"], dims["h2_p"]
    out_dim, out_p, lane = dims["out_dim"], dims["out_p"], dims["lane"]

    # Batch tile: multiple of 16 (bf16 sublane packing); pipelined over the grid.
    tb = min(tb_max, _round_up(B, 16))
    b_pad = pl.cdiv(B, tb) * tb

    xp = jnp.pad(state, ((0, b_pad - B), (0, d_p - d_in))).astype(jnp.bfloat16)

    kernel = partial(_policy_kernel, h1p=h1_p, h2p=h2_p, outp=out_p)

    out = pl.pallas_call(
        kernel,
        out_shape=jax.ShapeDtypeStruct((b_pad, out_p), jnp.float32),
        grid=(b_pad // tb,),
        in_specs=[
            pl.BlockSpec((tb, d_p), lambda i: (i, 0)),       # state tile (streamed)
            pl.BlockSpec((d_p, h1_p), lambda i: (0, 0)),     # w1 (VMEM-resident)
            pl.BlockSpec((h1_p, h2_p), lambda i: (0, 0)),    # w2
            pl.BlockSpec((h2_p, out_p), lambda i: (0, 0)),   # w3
            pl.BlockSpec((3, lane), lambda i: (0, 0)),       # packed biases
        ],
        out_specs=pl.BlockSpec((tb, out_p), lambda i: (i, 0)),
        compiler_params=pltpu.CompilerParams(
            dimension_semantics=("parallel",),               # split batch tiles across TCs
        ),
    )(xp, w1p, w2p, w3p, bias)

    return out[:B, :out_dim]


# --------------------------------------------------------------------------- #
# Init / reference
# --------------------------------------------------------------------------- #
def init_params(key, dim_h, n_actions, nvec):
    """Deterministic init mirroring nn.Linear default (U(-1/sqrt(fan_in), +))."""
    sum_nvec = int(sum(nvec))
    keys = jax.random.split(key, 6)

    def linear(kw, kb, fan_in, fan_out):
        bound = 1.0 / math.sqrt(fan_in)
        w = jax.random.uniform(kw, (fan_in, fan_out), jnp.float32, -bound, bound)
        b = jax.random.uniform(kb, (1, fan_out), jnp.float32, -bound, bound)
        return w, b

    w1, b1 = linear(keys[0], keys[1], dim_h, dim_h)          # fc1
    w2, b2 = linear(keys[2], keys[3], dim_h, n_actions)      # fc2
    w3, b3 = linear(keys[4], keys[5], n_actions, sum_nvec)   # probs_fc
    return (w1, b1, w2, b2, w3, b3)


def reference_forward(state, params):
    """Pure-JAX reference mimicking the kernel numerics (bf16 matmul inputs, f32 acc)."""
    w1, b1, w2, b2, w3, b3 = params
    bf, f32 = jnp.bfloat16, jnp.float32
    h1 = jnp.maximum(
        jnp.dot(state.astype(bf), w1.astype(bf), preferred_element_type=f32) + b1, 0.0)
    h2 = jnp.maximum(
        jnp.dot(h1.astype(bf), w2.astype(bf), preferred_element_type=f32) + b2, 0.0)
    return jnp.dot(h2.astype(bf), w3.astype(bf), preferred_element_type=f32) + b3


if __name__ == "__main__":
    # Small shapes consistent with the module: dim_h=128 (default), a 5-way
    # multi-categorical action space, n_actions latent width 32.
    dim_h = 128
    n_actions = 32
    nvec = [3, 4, 5, 3, 2]     # env.action_space.nvec -> sum = 17 logits
    batch = 8

    key = jax.random.PRNGKey(0)
    k_params, k_state = jax.random.split(key)
    params = init_params(k_params, dim_h, n_actions, nvec)
    state = jax.random.normal(k_state, (batch, dim_h), jnp.float32)

    prepared, dims = prepare_params(params)          # one-time pad / bf16 cast
    logits = policy_forward(state, prepared, dims)
    logits = jax.block_until_ready(logits)

    ref = reference_forward(state, params)
    assert logits.shape == (batch, sum(nvec))
    assert jnp.allclose(logits, ref, atol=1e-2, rtol=1e-2)

    # TODO(synk): the module's sample()/MultiCategoricalDistribution helpers are
    # outside forward() and are left to host-side JAX code (softmax + split).

    print("KERNEL_OK")
</pallas_src>

<mosaic_0001>
module attributes {stable_mosaic.version = 11 : i64} {
  func.func @_policy_kernel(%arg0: i32, %arg1: memref<16x128xbf16, #tpu.memory_space<vmem>>, %arg2: memref<128x128xbf16, #tpu.memory_space<vmem>>, %arg3: memref<128x128xbf16, #tpu.memory_space<vmem>>, %arg4: memref<128x128xbf16, #tpu.memory_space<vmem>>, %arg5: memref<3x128xf32, #tpu.memory_space<vmem>>, %arg6: memref<16x128xf32, #tpu.memory_space<vmem>>) attributes {dimension_semantics = [#tpu.dimension_semantics<parallel>], iteration_bounds = array<i64: 1>, scalar_prefetch = 0 : i64, scratch_operands = 0 : i64, tpu.core_type = #tpu.core_type<tc>, window_params = [{transform_indices = @transform_0, window_bounds = array<i64: 16, 128>}, {pipeline_mode = #tpu.pipeline_mode<synchronous>, transform_indices = @transform_1, window_bounds = array<i64: 128, 128>}, {pipeline_mode = #tpu.pipeline_mode<synchronous>, transform_indices = @transform_2, window_bounds = array<i64: 128, 128>}, {pipeline_mode = #tpu.pipeline_mode<synchronous>, transform_indices = @transform_3, window_bounds = array<i64: 128, 128>}, {pipeline_mode = #tpu.pipeline_mode<synchronous>, transform_indices = @transform_4, window_bounds = array<i64: 3, 128>}, {transform_indices = @transform_5, window_bounds = array<i64: 16, 128>}]} {
    %c0 = arith.constant 0 : index
    %c0_0 = arith.constant 0 : index
    %0 = vector.load %arg1[%c0, %c0_0] : memref<16x128xbf16, #tpu.memory_space<vmem>>, vector<16x128xbf16>
    %c0_1 = arith.constant 0 : index
    %c0_2 = arith.constant 0 : index
    %1 = vector.load %arg2[%c0_1, %c0_2] : memref<128x128xbf16, #tpu.memory_space<vmem>>, vector<128x128xbf16>
    %cst = arith.constant dense<0.000000e+00> : vector<16x128xf32>
    %2 = tpu.matmul %0, %1, %cst {dimension_numbers = #tpu.dot_dimension_numbers<[1], [0], [0], [1], [0, 0, 1, 1], [], []>} : vector<16x128xbf16>, vector<128x128xbf16>, vector<16x128xf32> -> vector<16x128xf32>
    %c0_3 = arith.constant 0 : index
    %c0_4 = arith.constant 0 : index
    %3 = vector.load %arg5[%c0_3, %c0_4] : memref<3x128xf32, #tpu.memory_space<vmem>>, vector<1x128xf32>
    %4 = vector.broadcast %3 : vector<1x128xf32> to vector<16x128xf32>
    %5 = arith.addf %2, %4 : vector<16x128xf32>
    %cst_5 = arith.constant 0.000000e+00 : f32
    %6 = vector.broadcast %cst_5 : f32 to vector<16x128xf32>
    %7 = arith.maximumf %5, %6 : vector<16x128xf32>
    %8 = arith.truncf %7 : vector<16x128xf32> to vector<16x128xbf16>
    %c0_6 = arith.constant 0 : index
    %c0_7 = arith.constant 0 : index
    %9 = vector.load %arg3[%c0_6, %c0_7] : memref<128x128xbf16, #tpu.memory_space<vmem>>, vector<128x128xbf16>
    %cst_8 = arith.constant dense<0.000000e+00> : vector<16x128xf32>
    %10 = tpu.matmul %8, %9, %cst_8 {dimension_numbers = #tpu.dot_dimension_numbers<[1], [0], [0], [1], [0, 0, 1, 1], [], []>} : vector<16x128xbf16>, vector<128x128xbf16>, vector<16x128xf32> -> vector<16x128xf32>
    %c1 = arith.constant 1 : index
    %c0_9 = arith.constant 0 : index
    %11 = vector.load %arg5[%c1, %c0_9] : memref<3x128xf32, #tpu.memory_space<vmem>>, vector<1x128xf32>
    %12 = vector.broadcast %11 : vector<1x128xf32> to vector<16x128xf32>
    %13 = arith.addf %10, %12 : vector<16x128xf32>
    %cst_10 = arith.constant 0.000000e+00 : f32
    %14 = vector.broadcast %cst_10 : f32 to vector<16x128xf32>
    %15 = arith.maximumf %13, %14 : vector<16x128xf32>
    %16 = arith.truncf %15 : vector<16x128xf32> to vector<16x128xbf16>
    %c0_11 = arith.constant 0 : index
    %c0_12 = arith.constant 0 : index
    %17 = vector.load %arg4[%c0_11, %c0_12] : memref<128x128xbf16, #tpu.memory_space<vmem>>, vector<128x128xbf16>
    %cst_13 = arith.constant dense<0.000000e+00> : vector<16x128xf32>
    %18 = tpu.matmul %16, %17, %cst_13 {dimension_numbers = #tpu.dot_dimension_numbers<[1], [0], [0], [1], [0, 0, 1, 1], [], []>} : vector<16x128xbf16>, vector<128x128xbf16>, vector<16x128xf32> -> vector<16x128xf32>
    %c2 = arith.constant 2 : index
    %c0_14 = arith.constant 0 : index
    %19 = vector.load %arg5[%c2, %c0_14] : memref<3x128xf32, #tpu.memory_space<vmem>>, vector<1x128xf32>
    %20 = vector.broadcast %19 : vector<1x128xf32> to vector<16x128xf32>
    %21 = arith.addf %18, %20 : vector<16x128xf32>
    %c0_15 = arith.constant 0 : index
    %c0_16 = arith.constant 0 : index
    %22 = vector.load %arg6[%c0_15, %c0_16] : memref<16x128xf32, #tpu.memory_space<vmem>>, vector<16x128xf32>
    tpu.vector_store %arg6[%c0_15, %c0_16], %21 {strides = array<i32>} : memref<16x128xf32, #tpu.memory_space<vmem>>, vector<16x128xf32>,
    return
  }
  func.func @transform_0(%arg0: i32) -> (i32, i32) {
    %c0_i32 = arith.constant 0 : i32
    %c0_i32_0 = arith.constant 0 : i32
    return %arg0, %c0_i32 : i32, i32
  }
  func.func @transform_1(%arg0: i32) -> (i32, i32) {
    %c0_i32 = arith.constant 0 : i32
    %c0_i32_0 = arith.constant 0 : i32
    %c0_i32_1 = arith.constant 0 : i32
    return %c0_i32, %c0_i32_0 : i32, i32
  }
  func.func @transform_2(%arg0: i32) -> (i32, i32) {
    %c0_i32 = arith.constant 0 : i32
    %c0_i32_0 = arith.constant 0 : i32
    %c0_i32_1 = arith.constant 0 : i32
    return %c0_i32, %c0_i32_0 : i32, i32
  }
  func.func @transform_3(%arg0: i32) -> (i32, i32) {
    %c0_i32 = arith.constant 0 : i32
    %c0_i32_0 = arith.constant 0 : i32
    %c0_i32_1 = arith.constant 0 : i32
    return %c0_i32, %c0_i32_0 : i32, i32
  }
  func.func @transform_4(%arg0: i32) -> (i32, i32) {
    %c0_i32 = arith.constant 0 : i32
    %c0_i32_0 = arith.constant 0 : i32
    %c0_i32_1 = arith.constant 0 : i32
    return %c0_i32, %c0_i32_0 : i32, i32
  }
  func.func @transform_5(%arg0: i32) -> (i32, i32) {
    %c0_i32 = arith.constant 0 : i32
    %c0_i32_0 = arith.constant 0 : i32
    return %arg0, %c0_i32 : i32, i32
  }
}

</mosaic_0001>

<llo_original>
// kernel: tpu_custom_call.1
$region0: #{tpu_custom_call.1}
  #allocation0 [shape = 'u32[]', space=smem, size = 0x4, offset = 0x4, fixed_abs, tag = 'smem constant byte address 0x4 - core index']
  #allocation1 [shape = 'u32[144,128]{1,0:T(1,128)}', space=vmem, size = 0x12000, scoped, tag = 'internal scratch']
  %s0 = inlined_call_operand.hbm [shape: bf16[16,128], index: 0, kind: input, shape index: {}]
  %s1 = inlined_call_operand.hbm [shape: bf16[128,128], index: 1, kind: input, shape index: {}]
  %s2 = inlined_call_operand.hbm [shape: bf16[128,128], index: 2, kind: input, shape index: {}]
  %s3 = inlined_call_operand.hbm [shape: bf16[128,128], index: 3, kind: input, shape index: {}]
  %s4 = inlined_call_operand.vmem [shape: f32[3,128], index: 4, kind: input, shape index: {}]
  %s5 = inlined_call_operand.hbm [shape: f32[16,128], index: 5, kind: output, shape index: {}]
  %s6 = sld [smem:[#allocation0]]
  $region46: #{tpu_custom_call.1} parent=0
    _
  %s8 = ssub.s32 1, %s6
  %s9 = scalar_select 0, %s8, %s6
  $region1: #{tpu_custom_call.1} parent=0
    #allocation2 [shape = 'u8[4096]{0}', space=vmem, size = 0x1000, scoped, tag = 'input window, operand 0, single buffered']
    #allocation3 [shape = 's32[1]{0}', space=sflag, size = 0x4, scoped, tag = 'scoped memory for tpu_custom_call.1']
    #allocation4 [shape = 's32[1]{0}', space=sflag, size = 0x4, scoped, tag = 'scoped memory for tpu_custom_call.1']
    #allocation5 [shape = 'u8[32768]{0}', space=vmem, size = 0x8000, scoped, tag = 'input window, operand 1, single buffered']
    #allocation6 [shape = 's32[1]{0}', space=sflag, size = 0x4, scoped, tag = 'scoped memory for tpu_custom_call.1']
    #allocation7 [shape = 'u8[32768]{0}', space=vmem, size = 0x8000, scoped, tag = 'input window, operand 2, single buffered']
    #allocation8 [shape = 'u8[32768]{0}', space=vmem, size = 0x8000, scoped, tag = 'input window, operand 3, single buffered']
    #allocation9 [shape = 's32[1]{0}', space=sflag, size = 0x4, scoped, tag = 'scoped memory for tpu_custom_call.1']
    #allocation10 [shape = 'u8[8192]{0}', space=vmem, size = 0x2000, scoped, tag = 'output window, operand 0, single buffered']
    %10 = vsyncpa [#allocation3], 0
    %11 = vsyncpa [#allocation6], 0
    %12 = vsyncpa [#allocation9], 0
    %13 = vsyncpa [#allocation4], 0
    // Predicated region
    $region2: #{tpu_custom_call.1} parent=1 // pred_check
      _
    $region3: #{tpu_custom_call.1} parent=1 // pred_check_branch
      %15 = sbr.rel (0) target = $region5
    $region4: #{tpu_custom_call.1} parent=1 // pred_region
      %s17 = ssub.s32 128, 128
      %18 = vsyncadd [#allocation3], %s17
      %s19 = sshll.u32 [#allocation2], 4
      %s20 = int_to_ptr.vmem [resolvable:$true] %s19
      %25 = dma.hbm_to_vmem [thread:$0]  %s0, 128, %s20, [#allocation3], 64, 64, 4
    $region5: #{tpu_custom_call.1} parent=1 // pred_fallthru
      _
    // Predicated region
    $region6: #{tpu_custom_call.1} parent=1 // pred_check
      _
    $region7: #{tpu_custom_call.1} parent=1 // pred_check_branch
      %27 = sbr.rel (0) target = $region9
    $region8: #{tpu_custom_call.1} parent=1 // pred_region
      %s29 = ssub.s32 1024, 1024
      %30 = vsyncadd [#allocation6], %s29
      %s31 = sshll.u32 [#allocation5], 4
      %s32 = int_to_ptr.vmem [resolvable:$true] %s31
      %37 = dma.hbm_to_vmem [thread:$0]  %s1, 1024, %s32, [#allocation6], 64, 64, 4
    $region9: #{tpu_custom_call.1} parent=1 // pred_fallthru
      _
    // Predicated region
    $region10: #{tpu_custom_call.1} parent=1 // pred_check
      _
    $region11: #{tpu_custom_call.1} parent=1 // pred_check_branch
      %39 = sbr.rel (0) target = $region13
    $region12: #{tpu_custom_call.1} parent=1 // pred_region
      %s41 = ssub.s32 1024, 1024
      %42 = vsyncadd [#allocation6], %s41
      %s43 = sshll.u32 [#allocation7], 4
      %s44 = int_to_ptr.vmem [resolvable:$true] %s43
      %49 = dma.hbm_to_vmem [thread:$0]  %s2, 1024, %s44, [#allocation6], 64, 64, 4
    $region13: #{tpu_custom_call.1} parent=1 // pred_fallthru
      _
    // Predicated region
    $region14: #{tpu_custom_call.1} parent=1 // pred_check
      _
    $region15: #{tpu_custom_call.1} parent=1 // pred_check_branch
      %51 = sbr.rel (0) target = $region17
    $region16: #{tpu_custom_call.1} parent=1 // pred_region
      %s53 = ssub.s32 1024, 1024
      %54 = vsyncadd [#allocation9], %s53
      %s55 = sshll.u32 [#allocation8], 4
      %s56 = int_to_ptr.vmem [resolvable:$true] %s55
      %61 = dma.hbm_to_vmem [thread:$0]  %s3, 1024, %s56, [#allocation9], 64, 64, 4
    $region17: #{tpu_custom_call.1} parent=1 // pred_fallthru
      _
    // Predicated region
    $region18: #{tpu_custom_call.1} parent=1 // pred_check
      _
    $region19: #{tpu_custom_call.1} parent=1 // pred_check_branch
      %63 = sbr.rel (0) target = $region21
    $region20: #{tpu_custom_call.1} parent=1 // pred_region
      _
    $region21: #{tpu_custom_call.1} parent=1 // pred_fallthru
      _
    // Predicated region
    $region22: #{tpu_custom_call.1} parent=1 // pred_check
      _
    $region23: #{tpu_custom_call.1} parent=1 // pred_check_branch
      %65 = sbr.rel (0) target = $region25
    $region24: #{tpu_custom_call.1} parent=1 // pred_region
      %66 = dma.done [#allocation3], 128
    $region25: #{tpu_custom_call.1} parent=1 // pred_fallthru
      _
    // Predicated region
    $region26: #{tpu_custom_call.1} parent=1 // pred_check
      _
    $region27: #{tpu_custom_call.1} parent=1 // pred_check_branch
      %68 = sbr.rel (0) target = $region29
    $region28: #{tpu_custom_call.1} parent=1 // pred_region
      %69 = dma.done [#allocation6], 1024
    $region29: #{tpu_custom_call.1} parent=1 // pred_fallthru
      _
    // Predicated region
    $region30: #{tpu_custom_call.1} parent=1 // pred_check
      _
    $region31: #{tpu_custom_call.1} parent=1 // pred_check_branch
      %71 = sbr.rel (0) target = $region33
    $region32: #{tpu_custom_call.1} parent=1 // pred_region
      %72 = dma.done [#allocation6], 1024
    $region33: #{tpu_custom_call.1} parent=1 // pred_fallthru
      _
    // Predicated region
    $region34: #{tpu_custom_call.1} parent=1 // pred_check
      _
    $region35: #{tpu_custom_call.1} parent=1 // pred_check_branch
      %74 = sbr.rel (0) target = $region37
    $region36: #{tpu_custom_call.1} parent=1 // pred_region
      %75 = dma.done [#allocation9], 1024
    $region37: #{tpu_custom_call.1} parent=1 // pred_fallthru
      _
    %v77 = vld [vmem:[#allocation2] sm:$0xf]
    %v78 = vld [vmem:[#allocation2 + $0x4] sm:$0xf]
    %v79 = vld [vmem:[#allocation5] sm:$0xf]
    %v80 = vld [vmem:[#allocation5 + $0x4] sm:$0xf]
    %v81 = vld [vmem:[#allocation5 + $0x8] sm:$0xf]
    %v82 = vld [vmem:[#allocation5 + $0xc] sm:$0xf]
    %v83 = vld [vmem:[#allocation5 + $0x10] sm:$0xf]
    %v84 = vld [vmem:[#allocation5 + $0x14] sm:$0xf]
    %v85 = vld [vmem:[#allocation5 + $0x18] sm:$0xf]
    %v86 = vld [vmem:[#allocation5 + $0x1c] sm:$0xf]
    %v87 = vld [vmem:[#allocation5 + $0x20] sm:$0xf]
    %v88 = vld [vmem:[#allocation5 + $0x24] sm:$0xf]
    %v89 = vld [vmem:[#allocation5 + $0x28] sm:$0xf]
    %v90 = vld [vmem:[#allocation5 + $0x2c] sm:$0xf]
    %v91 = vld [vmem:[#allocation5 + $0x30] sm:$0xf]
    %v92 = vld [vmem:[#allocation5 + $0x34] sm:$0xf]
    %v93 = vld [vmem:[#allocation5 + $0x38] sm:$0xf]
    %v94 = vld [vmem:[#allocation5 + $0x3c] sm:$0xf]
    %v95 = vld [vmem:[%s4] sm:$0x1]
    %v96 = vlaneseq
    %v97 = vshrl.u32 %v96, 7
    %v98 = vsub.s32 0, %v97
    %v99 = vrot.slane %v95, %v98
    %v102 = vunpack.c.l.b16 %v77
    %v103 = vunpack.c.l.b16 %v78
    %v104 = vpack.c.b16 %v103, %v102
    %v122 = vunpack.c.l.b16 %v79
    %v123 = vunpack.c.l.b16 %v80
    %v124 = vunpack.c.l.b16 %v81
    %v125 = vunpack.c.l.b16 %v82
    %v126 = vunpack.c.l.b16 %v83
    %v127 = vunpack.c.l.b16 %v84
    %v128 = vunpack.c.l.b16 %v85
    %v129 = vunpack.c.l.b16 %v86
    %v130 = vunpack.c.l.b16 %v87
    %v131 = vunpack.c.l.b16 %v88
    %v132 = vunpack.c.l.b16 %v89
    %v133 = vunpack.c.l.b16 %v90
    %v134 = vunpack.c.l.b16 %v91
    %v135 = vunpack.c.l.b16 %v92
    %v136 = vunpack.c.l.b16 %v93
    %v137 = vunpack.c.l.b16 %v94
    %v138 = vpack.c.b16 %v123, %v122
    %v139 = vpack.c.b16 %v125, %v124
    %v140 = vpack.c.b16 %v127, %v126
    %v141 = vpack.c.b16 %v129, %v128
    %v142 = vpack.c.b16 %v131, %v130
    %v143 = vpack.c.b16 %v133, %v132
    %v144 = vpack.c.b16 %v135, %v134
    %v145 = vpack.c.b16 %v137, %v136
    %154 = vmatprep.subr.bf16.mxu0 0
    %155 = vmatpush1.bf16.msra.mxu0 %v138
    %156 = vmatprep.subr.bf16.mxu0 0
    %157 = vmatpush1.bf16.msra.mxu0 %v139
    %158 = vmatprep.subr.bf16.mxu0 0
    %159 = vmatpush1.bf16.msra.mxu0 %v140
    %160 = vmatprep.subr.bf16.mxu0 0
    %161 = vmatpush1.bf16.msra.mxu0 %v141
    %162 = vmatprep.subr.bf16.mxu0 0
    %163 = vmatpush1.bf16.msra.mxu0 %v142
    %164 = vmatprep.subr.bf16.mxu0 0
    %165 = vmatpush1.bf16.msra.mxu0 %v143
    %166 = vmatprep.subr.bf16.mxu0 0
    %167 = vmatpush1.bf16.msra.mxu0 %v144
    %168 = vmatprep.subr.bf16.mxu0 0
    %169 = vmatpush1.bf16.msra.mxu0 %v145
    %170 = vmatprep.subr.bf16.mxu0 0
    %171 = vmatpush1.bf16.msra.mxu0 0
    %172 = vmatprep.subr.bf16.mxu0 0
    %173 = vmatpush1.bf16.msra.mxu0 0
    %174 = vmatprep.subr.bf16.mxu0 0
    %175 = vmatpush1.bf16.msra.mxu0 0
    %176 = vmatprep.subr.bf16.mxu0 0
    %177 = vmatpush1.bf16.msra.mxu0 0
    %178 = vmatprep.subr.bf16.mxu0 0
    %179 = vmatpush1.bf16.msra.mxu0 0
    %180 = vmatprep.subr.bf16.mxu0 0
    %181 = vmatpush1.bf16.msra.mxu0 0
    %182 = vmatprep.subr.bf16.mxu0 0
    %183 = vmatpush1.bf16.msra.mxu0 0
    %184 = vmatprep.subr.bf16.mxu0 0
    %185 = vmatpush1.bf16.msra.mxu0 0
    %186 = vmatprep.mubr.bf16.mxu0 0
    %187 = vmatmul.mubr.bf16.gmra.mrb[0].mxu0 %v104
    %v188 = vpop.f32.mrb[0].mxu0
    %v189 = vadd.f32 %v99, %v188
    %v190 = vpop.f32.mrb[0].mxu0
    %v191 = vpop.f32.mrb[0].mxu0
    %v192 = vadd.f32 %v99, %v191
    %v193 = vpop.f32.mrb[0].mxu0
    %194 = vdwg.mxu0
    %v195 = vmax.f32 %v189, 0.0
    %v196 = vmax.f32 %v192, 0.0
    %v197 = vpack.c.bf16 %v196, %v195
    %v198 = vld [vmem:[#allocation7] sm:$0xf]
    %v199 = vld [vmem:[#allocation7 + $0x4] sm:$0xf]
    %v200 = vld [vmem:[#allocation7 + $0x8] sm:$0xf]
    %v201 = vld [vmem:[#allocation7 + $0xc] sm:$0xf]
    %v202 = vld [vmem:[#allocation7 + $0x10] sm:$0xf]
    %v203 = vld [vmem:[#allocation7 + $0x14] sm:$0xf]
    %v204 = vld [vmem:[#allocation7 + $0x18] sm:$0xf]
    %v205 = vld [vmem:[#allocation7 + $0x1c] sm:$0xf]
    %v206 = vld [vmem:[#allocation7 + $0x20] sm:$0xf]
    %v207 = vld [vmem:[#allocation7 + $0x24] sm:$0xf]
    %v208 = vld [vmem:[#allocation7 + $0x28] sm:$0xf]
    %v209 = vld [vmem:[#allocation7 + $0x2c] sm:$0xf]
    %v210 = vld [vmem:[#allocation7 + $0x30] sm:$0xf]
    %v211 = vld [vmem:[#allocation7 + $0x34] sm:$0xf]
    %v212 = vld [vmem:[#allocation7 + $0x38] sm:$0xf]
    %v213 = vld [vmem:[#allocation7 + $0x3c] sm:$0xf]
    %v214 = vld [vmem:[%s4 + $0x1] sm:$0x1]
    %v215 = vlaneseq
    %v216 = vshrl.u32 %v215, 7
    %v217 = vsub.s32 0, %v216
    %v218 = vrot.slane %v214, %v217
    %v235 = vunpack.c.l.b16 %v198
    %v236 = vunpack.c.l.b16 %v199
    %v237 = vunpack.c.l.b16 %v200
    %v238 = vunpack.c.l.b16 %v201
    %v239 = vunpack.c.l.b16 %v202
    %v240 = vunpack.c.l.b16 %v203
    %v241 = vunpack.c.l.b16 %v204
    %v242 = vunpack.c.l.b16 %v205
    %v243 = vunpack.c.l.b16 %v206
    %v244 = vunpack.c.l.b16 %v207
    %v245 = vunpack.c.l.b16 %v208
    %v246 = vunpack.c.l.b16 %v209
    %v247 = vunpack.c.l.b16 %v210
    %v248 = vunpack.c.l.b16 %v211
    %v249 = vunpack.c.l.b16 %v212
    %v250 = vunpack.c.l.b16 %v213
    %v251 = vpack.c.b16 %v236, %v235
    %v252 = vpack.c.b16 %v238, %v237
    %v253 = vpack.c.b16 %v240, %v239
    %v254 = vpack.c.b16 %v242, %v241
    %v255 = vpack.c.b16 %v244, %v243
    %v256 = vpack.c.b16 %v246, %v245
    %v257 = vpack.c.b16 %v248, %v247
    %v258 = vpack.c.b16 %v250, %v249
    %267 = vmatprep.subr.bf16.mxu0 0
    %268 = vmatpush1.bf16.msra.mxu0 %v251
    %269 = vmatprep.subr.bf16.mxu0 0
    %270 = vmatpush1.bf16.msra.mxu0 %v252
    %271 = vmatprep.subr.bf16.mxu0 0
    %272 = vmatpush1.bf16.msra.mxu0 %v253
    %273 = vmatprep.subr.bf16.mxu0 0
    %274 = vmatpush1.bf16.msra.mxu0 %v254
    %275 = vmatprep.subr.bf16.mxu0 0
    %276 = vmatpush1.bf16.msra.mxu0 %v255
    %277 = vmatprep.subr.bf16.mxu0 0
    %278 = vmatpush1.bf16.msra.mxu0 %v256
    %279 = vmatprep.subr.bf16.mxu0 0
    %280 = vmatpush1.bf16.msra.mxu0 %v257
    %281 = vmatprep.subr.bf16.mxu0 0
    %282 = vmatpush1.bf16.msra.mxu0 %v258
    %283 = vmatprep.subr.bf16.mxu0 0
    %284 = vmatpush1.bf16.msra.mxu0 0
    %285 = vmatprep.subr.bf16.mxu0 0
    %286 = vmatpush1.bf16.msra.mxu0 0
    %287 = vmatprep.subr.bf16.mxu0 0
    %288 = vmatpush1.bf16.msra.mxu0 0
    %289 = vmatprep.subr.bf16.mxu0 0
    %290 = vmatpush1.bf16.msra.mxu0 0
    %291 = vmatprep.subr.bf16.mxu0 0
    %292 = vmatpush1.bf16.msra.mxu0 0
    %293 = vmatprep.subr.bf16.mxu0 0
    %294 = vmatpush1.bf16.msra.mxu0 0
    %295 = vmatprep.subr.bf16.mxu0 0
    %296 = vmatpush1.bf16.msra.mxu0 0
    %297 = vmatprep.subr.bf16.mxu0 0
    %298 = vmatpush1.bf16.msra.mxu0 0
    %299 = vmatprep.mubr.bf16.mxu0 0
    %300 = vmatmul.mubr.bf16.gmra.mrb[0].mxu0 %v197
    %v301 = vpop.f32.mrb[0].mxu0
    %v302 = vadd.f32 %v218, %v301
    %v303 = vpop.f32.mrb[0].mxu0
    %v304 = vpop.f32.mrb[0].mxu0
    %v305 = vadd.f32 %v218, %v304
    %v306 = vpop.f32.mrb[0].mxu0
    %307 = vdwg.mxu0
    %v308 = vmax.f32 %v302, 0.0
    %v309 = vmax.f32 %v305, 0.0
    %v310 = vpack.c.bf16 %v309, %v308
    %v311 = vld [vmem:[#allocation8] sm:$0xf]
    %v312 = vld [vmem:[#allocation8 + $0x4] sm:$0xf]
    %v313 = vld [vmem:[#allocation8 + $0x8] sm:$0xf]
    %v314 = vld [vmem:[#allocation8 + $0xc] sm:$0xf]
    %v315 = vld [vmem:[#allocation8 + $0x10] sm:$0xf]
    %v316 = vld [vmem:[#allocation8 + $0x14] sm:$0xf]
    %v317 = vld [vmem:[#allocation8 + $0x18] sm:$0xf]
    %v318 = vld [vmem:[#allocation8 + $0x1c] sm:$0xf]
    %v319 = vld [vmem:[#allocation8 + $0x20] sm:$0xf]
    %v320 = vld [vmem:[#allocation8 + $0x24] sm:$0xf]
    %v321 = vld [vmem:[#allocation8 + $0x28] sm:$0xf]
    %v322 = vld [vmem:[#allocation8 + $0x2c] sm:$0xf]
    %v323 = vld [vmem:[#allocation8 + $0x30] sm:$0xf]
    %v324 = vld [vmem:[#allocation8 + $0x34] sm:$0xf]
    %v325 = vld [vmem:[#allocation8 + $0x38] sm:$0xf]
    %v326 = vld [vmem:[#allocation8 + $0x3c] sm:$0xf]
    %v327 = vld [vmem:[%s4 + $0x2] sm:$0x1]
    %v328 = vlaneseq
    %v329 = vshrl.u32 %v328, 7
    %v330 = vsub.s32 0, %v329
    %v331 = vrot.slane %v327, %v330
    %v348 = vunpack.c.l.b16 %v311
    %v349 = vunpack.c.l.b16 %v312
    %v350 = vunpack.c.l.b16 %v313
    %v351 = vunpack.c.l.b16 %v314
    %v352 = vunpack.c.l.b16 %v315
    %v353 = vunpack.c.l.b16 %v316
    %v354 = vunpack.c.l.b16 %v317
    %v355 = vunpack.c.l.b16 %v318
    %v356 = vunpack.c.l.b16 %v319
    %v357 = vunpack.c.l.b16 %v320
    %v358 = vunpack.c.l.b16 %v321
    %v359 = vunpack.c.l.b16 %v322
    %v360 = vunpack.c.l.b16 %v323
    %v361 = vunpack.c.l.b16 %v324
    %v362 = vunpack.c.l.b16 %v325
    %v363 = vunpack.c.l.b16 %v326
    %v364 = vpack.c.b16 %v349, %v348
    %v365 = vpack.c.b16 %v351, %v350
    %v366 = vpack.c.b16 %v353, %v352
    %v367 = vpack.c.b16 %v355, %v354
    %v368 = vpack.c.b16 %v357, %v356
    %v369 = vpack.c.b16 %v359, %v358
    %v370 = vpack.c.b16 %v361, %v360
    %v371 = vpack.c.b16 %v363, %v362
    %380 = vmatprep.subr.bf16.mxu0 0
    %381 = vmatpush1.bf16.msra.mxu0 %v364
    %382 = vmatprep.subr.bf16.mxu0 0
    %383 = vmatpush1.bf16.msra.mxu0 %v365
    %384 = vmatprep.subr.bf16.mxu0 0
    %385 = vmatpush1.bf16.msra.mxu0 %v366
    %386 = vmatprep.subr.bf16.mxu0 0
    %387 = vmatpush1.bf16.msra.mxu0 %v367
    %388 = vmatprep.subr.bf16.mxu0 0
    %389 = vmatpush1.bf16.msra.mxu0 %v368
    %390 = vmatprep.subr.bf16.mxu0 0
    %391 = vmatpush1.bf16.msra.mxu0 %v369
    %392 = vmatprep.subr.bf16.mxu0 0
    %393 = vmatpush1.bf16.msra.mxu0 %v370
    %394 = vmatprep.subr.bf16.mxu0 0
    %395 = vmatpush1.bf16.msra.mxu0 %v371
    %396 = vmatprep.subr.bf16.mxu0 0
    %397 = vmatpush1.bf16.msra.mxu0 0
    %398 = vmatprep.subr.bf16.mxu0 0
    %399 = vmatpush1.bf16.msra.mxu0 0
    %400 = vmatprep.subr.bf16.mxu0 0
    %401 = vmatpush1.bf16.msra.mxu0 0
    %402 = vmatprep.subr.bf16.mxu0 0
    %403 = vmatpush1.bf16.msra.mxu0 0
    %404 = vmatprep.subr.bf16.mxu0 0
    %405 = vmatpush1.bf16.msra.mxu0 0
    %406 = vmatprep.subr.bf16.mxu0 0
    %407 = vmatpush1.bf16.msra.mxu0 0
    %408 = vmatprep.subr.bf16.mxu0 0
    %409 = vmatpush1.bf16.msra.mxu0 0
    %410 = vmatprep.subr.bf16.mxu0 0
    %411 = vmatpush1.bf16.msra.mxu0 0
    %412 = vmatprep.mubr.bf16.mxu0 0
    %413 = vmatmul.mubr.bf16.gmra.mrb[0].mxu0 %v310
    %v414 = vpop.f32.mrb[0].mxu0
    %v415 = vadd.f32 %v331, %v414
    %v416 = vpop.f32.mrb[0].mxu0
    %v417 = vpop.f32.mrb[0].mxu0
    %v418 = vadd.f32 %v331, %v417
    %v419 = vpop.f32.mrb[0].mxu0
    %420 = vdwg.mxu0
    %421 = vst [vmem:[#allocation10] sm:$0xff] %v415
    %422 = vst [vmem:[#allocation10 + $0x8] sm:$0xff] %v418
    // Predicated region
    $region38: #{tpu_custom_call.1} parent=1 // pred_check
      _
    $region39: #{tpu_custom_call.1} parent=1 // pred_check_branch
      %424 = sbr.rel (0) target = $region41
    $region40: #{tpu_custom_call.1} parent=1 // pred_region
      %s426 = ssub.s32 256, 256
      %427 = vsyncadd [#allocation4], %s426
      %s428 = sshll.u32 [#allocation10], 4
      %s429 = int_to_ptr.vmem [resolvable:$true] %s428
      %434 = dma.vmem_to_hbm [thread:$0]  %s429, 256, %s5, [#allocation4], 128, 128, 8
    $region41: #{tpu_custom_call.1} parent=1 // pred_fallthru
      _
    // Predicated region
    $region42: #{tpu_custom_call.1} parent=1 // pred_check
      _
    $region43: #{tpu_custom_call.1} parent=1 // pred_check_branch
      %436 = sbr.rel (0) target = $region45
    $region44: #{tpu_custom_call.1} parent=1 // pred_region
      %437 = dma.done [#allocation4], 256
    $region45: #{tpu_custom_call.1} parent=1 // pred_fallthru
      _
    %438 = vsyncpa [#allocation3], 1
    %439 = vsyncpa [#allocation6], 1
    %440 = vsyncpa [#allocation9], 1
    %441 = vsyncpa [#allocation4], 1

</llo_original>
